<compile_context>
chip_gen: v6e
topology: v6e:2x2x1
jax: 0.10.0
libtpu: 0.0.40
codegen_flags: <defaults>
</compile_context>

<pallas_src>
import functools

import jax
import jax.numpy as jnp
from jax.experimental import pallas as pl
from jax.experimental.pallas import tpu as pltpu


# ------------------------------- Pallas kernel ------------------------------ #

def _mlp_fused_kernel(x_ref, w1_ref, b1_ref, w2_ref, b2_ref, o_ref):
    """One row-tile of:  silu(x @ w1 + b1) @ w2 + b2  (f32 accumulation)."""
    # fc1 on the MXU (bf16 inputs, f32 accumulate) + bias epilogue.
    h = jnp.dot(x_ref[...], w1_ref[...],
                preferred_element_type=jnp.float32) + b1_ref[...]
    # SiLU epilogue: x * sigmoid(x)  (EUP handles the exp; VPU the mul).
    h = h * jax.nn.sigmoid(h)
    # fc2 on the MXU; hidden is re-quantized to bf16 to stay on the fast path.
    o = jnp.dot(h.astype(w2_ref.dtype), w2_ref[...],
                preferred_element_type=jnp.float32) + b2_ref[...]
    o_ref[...] = o.astype(o_ref.dtype)


def mlp_pallas(x, w1, b1, w2, b2, *, block_rows=64):
    """Fused Mlp forward.

    x : [..., C_in]   (any leading dims, flattened to rows)
    w1: [C_in, H], b1: [H], w2: [H, C_out], b2: [C_out]
    returns [..., C_out] float32
    """
    lead = x.shape[:-1]
    c_in = x.shape[-1]
    hidden = w1.shape[1]
    c_out = w2.shape[1]

    x2 = x.reshape(-1, c_in)
    m = x2.shape[0]

    tm = block_rows
    m_pad = pl.cdiv(m, tm) * tm
    if m_pad != m:
        # Fallback only — demo shapes divide evenly so this branch is dead.
        x2 = jnp.pad(x2, ((0, m_pad - m), (0, 0)))

    xb = x2.astype(jnp.bfloat16)
    w1b = w1.astype(jnp.bfloat16)
    w2b = w2.astype(jnp.bfloat16)
    b1f = b1.reshape(1, hidden).astype(jnp.float32)
    b2f = b2.reshape(1, c_out).astype(jnp.float32)

    out = pl.pallas_call(
        _mlp_fused_kernel,
        out_shape=jax.ShapeDtypeStruct((m_pad, c_out), jnp.float32),
        grid=(m_pad // tm,),
        in_specs=[
            pl.BlockSpec((tm, c_in), lambda i: (i, 0)),      # x row tile
            pl.BlockSpec((c_in, hidden), lambda i: (0, 0)),  # w1 (resident)
            pl.BlockSpec((1, hidden), lambda i: (0, 0)),     # b1
            pl.BlockSpec((hidden, c_out), lambda i: (0, 0)), # w2 (resident)
            pl.BlockSpec((1, c_out), lambda i: (0, 0)),      # b2
        ],
        out_specs=pl.BlockSpec((tm, c_out), lambda i: (i, 0)),
        compiler_params=pltpu.CompilerParams(
            dimension_semantics=("parallel",)),
    )(xb, w1b, b1f, w2b, b2f)

    if m_pad != m:
        out = out[:m]
    return out.reshape(*lead, c_out)


# --------------------------------- reference -------------------------------- #

def mlp_reference(x, w1, b1, w2, b2):
    """Pure-JAX reference with the same bf16-operand / f32-accumulate recipe."""
    lead = x.shape[:-1]
    x2 = x.reshape(-1, x.shape[-1]).astype(jnp.bfloat16)
    h = jnp.dot(x2, w1.astype(jnp.bfloat16),
                preferred_element_type=jnp.float32) + b1.astype(jnp.float32)
    h = h * jax.nn.sigmoid(h)
    o = jnp.dot(h.astype(jnp.bfloat16), w2.astype(jnp.bfloat16),
                preferred_element_type=jnp.float32) + b2.astype(jnp.float32)
    return o.reshape(*lead, -1)


# ----------------------------------- main ------------------------------------ #

if __name__ == "__main__":
    # PVT-style token tensor: [B, N, C] with mlp_ratio-expanded hidden width.
    B, N = 2, 64
    in_features, hidden_features, out_features = 128, 256, 128

    key = jax.random.PRNGKey(0)
    kx, k1, k2, k3, k4 = jax.random.split(key, 5)
    x = jax.random.normal(kx, (B, N, in_features), dtype=jnp.float32)
    w1 = 0.02 * jax.random.normal(k1, (in_features, hidden_features), jnp.float32)
    b1 = 0.02 * jax.random.normal(k2, (hidden_features,), jnp.float32)
    w2 = 0.02 * jax.random.normal(k3, (hidden_features, out_features), jnp.float32)
    b2 = 0.02 * jax.random.normal(k4, (out_features,), jnp.float32)

    fwd = jax.jit(functools.partial(mlp_pallas, block_rows=64))
    y = fwd(x, w1, b1, w2, b2)
    jax.block_until_ready(y)

    assert y.shape == (B, N, out_features), y.shape
    y_ref = mlp_reference(x, w1, b1, w2, b2)
    assert jnp.allclose(y, y_ref, atol=5e-2, rtol=5e-2), (
        float(jnp.max(jnp.abs(y - y_ref))))

    print("KERNEL_OK")
</pallas_src>

<mosaic_0001>
module attributes {stable_mosaic.version = 11 : i64} {
  func.func @_mlp_fused_kernel(%arg0: i32, %arg1: memref<64x128xbf16, #tpu.memory_space<vmem>>, %arg2: memref<128x256xbf16, #tpu.memory_space<vmem>>, %arg3: memref<1x256xf32, #tpu.memory_space<vmem>>, %arg4: memref<256x128xbf16, #tpu.memory_space<vmem>>, %arg5: memref<1x128xf32, #tpu.memory_space<vmem>>, %arg6: memref<64x128xf32, #tpu.memory_space<vmem>>) attributes {dimension_semantics = [#tpu.dimension_semantics<parallel>], iteration_bounds = array<i64: 2>, scalar_prefetch = 0 : i64, scratch_operands = 0 : i64, tpu.core_type = #tpu.core_type<tc>, window_params = [{transform_indices = @transform_0, window_bounds = array<i64: 64, 128>}, {pipeline_mode = #tpu.pipeline_mode<synchronous>, transform_indices = @transform_1, window_bounds = array<i64: 128, 256>}, {pipeline_mode = #tpu.pipeline_mode<synchronous>, transform_indices = @transform_2, window_bounds = array<i64: 1, 256>}, {pipeline_mode = #tpu.pipeline_mode<synchronous>, transform_indices = @transform_3, window_bounds = array<i64: 256, 128>}, {pipeline_mode = #tpu.pipeline_mode<synchronous>, transform_indices = @transform_4, window_bounds = array<i64: 1, 128>}, {transform_indices = @transform_5, window_bounds = array<i64: 64, 128>}]} {
    %c0 = arith.constant 0 : index
    %c0_0 = arith.constant 0 : index
    %0 = vector.load %arg1[%c0, %c0_0] : memref<64x128xbf16, #tpu.memory_space<vmem>>, vector<64x128xbf16>
    %c0_1 = arith.constant 0 : index
    %c0_2 = arith.constant 0 : index
    %1 = vector.load %arg2[%c0_1, %c0_2] : memref<128x256xbf16, #tpu.memory_space<vmem>>, vector<128x256xbf16>
    %cst = arith.constant dense<0.000000e+00> : vector<64x256xf32>
    %2 = tpu.matmul %0, %1, %cst {dimension_numbers = #tpu.dot_dimension_numbers<[1], [0], [0], [1], [0, 0, 1, 1], [], []>} : vector<64x128xbf16>, vector<128x256xbf16>, vector<64x256xf32> -> vector<64x256xf32>
    %c0_3 = arith.constant 0 : index
    %c0_4 = arith.constant 0 : index
    %3 = vector.load %arg3[%c0_3, %c0_4] : memref<1x256xf32, #tpu.memory_space<vmem>>, vector<1x256xf32>
    %4 = vector.broadcast %3 : vector<1x256xf32> to vector<64x256xf32>
    %5 = arith.addf %2, %4 : vector<64x256xf32>
    %6 = arith.negf %5 : vector<64x256xf32>
    %7 = math.exp %6 : vector<64x256xf32>
    %cst_5 = arith.constant 1.000000e+00 : f32
    %8 = vector.broadcast %cst_5 : f32 to vector<64x256xf32>
    %9 = arith.addf %8, %7 : vector<64x256xf32>
    %10 = arith.divf %8, %9 : vector<64x256xf32>
    %11 = arith.mulf %5, %10 : vector<64x256xf32>
    %12 = arith.truncf %11 : vector<64x256xf32> to vector<64x256xbf16>
    %c0_6 = arith.constant 0 : index
    %c0_7 = arith.constant 0 : index
    %13 = vector.load %arg4[%c0_6, %c0_7] : memref<256x128xbf16, #tpu.memory_space<vmem>>, vector<256x128xbf16>
    %cst_8 = arith.constant dense<0.000000e+00> : vector<64x128xf32>
    %14 = tpu.matmul %12, %13, %cst_8 {dimension_numbers = #tpu.dot_dimension_numbers<[1], [0], [0], [1], [0, 0, 1, 1], [], []>} : vector<64x256xbf16>, vector<256x128xbf16>, vector<64x128xf32> -> vector<64x128xf32>
    %c0_9 = arith.constant 0 : index
    %c0_10 = arith.constant 0 : index
    %15 = vector.load %arg5[%c0_9, %c0_10] : memref<1x128xf32, #tpu.memory_space<vmem>>, vector<1x128xf32>
    %16 = vector.broadcast %15 : vector<1x128xf32> to vector<64x128xf32>
    %17 = arith.addf %14, %16 : vector<64x128xf32>
    %c0_11 = arith.constant 0 : index
    %c0_12 = arith.constant 0 : index
    %18 = vector.load %arg6[%c0_11, %c0_12] : memref<64x128xf32, #tpu.memory_space<vmem>>, vector<64x128xf32>
    tpu.vector_store %arg6[%c0_11, %c0_12], %17 {strides = array<i32>} : memref<64x128xf32, #tpu.memory_space<vmem>>, vector<64x128xf32>,
    return
  }
  func.func @transform_0(%arg0: i32) -> (i32, i32) {
    %c0_i32 = arith.constant 0 : i32
    %c0_i32_0 = arith.constant 0 : i32
    return %arg0, %c0_i32 : i32, i32
  }
  func.func @transform_1(%arg0: i32) -> (i32, i32) {
    %c0_i32 = arith.constant 0 : i32
    %c0_i32_0 = arith.constant 0 : i32
    %c0_i32_1 = arith.constant 0 : i32
    return %c0_i32, %c0_i32_0 : i32, i32
  }
  func.func @transform_2(%arg0: i32) -> (i32, i32) {
    %c0_i32 = arith.constant 0 : i32
    %c0_i32_0 = arith.constant 0 : i32
    %c0_i32_1 = arith.constant 0 : i32
    return %c0_i32, %c0_i32_0 : i32, i32
  }
  func.func @transform_3(%arg0: i32) -> (i32, i32) {
    %c0_i32 = arith.constant 0 : i32
    %c0_i32_0 = arith.constant 0 : i32
    %c0_i32_1 = arith.constant 0 : i32
    return %c0_i32, %c0_i32_0 : i32, i32
  }
  func.func @transform_4(%arg0: i32) -> (i32, i32) {
    %c0_i32 = arith.constant 0 : i32
    %c0_i32_0 = arith.constant 0 : i32
    %c0_i32_1 = arith.constant 0 : i32
    return %c0_i32, %c0_i32_0 : i32, i32
  }
  func.func @transform_5(%arg0: i32) -> (i32, i32) {
    %c0_i32 = arith.constant 0 : i32
    %c0_i32_0 = arith.constant 0 : i32
    return %arg0, %c0_i32 : i32, i32
  }
}

</mosaic_0001>

<llo_original>
// kernel: mlp_pallas.1
$region0: #{mlp_pallas.1}
  #allocation0 [shape = 'u32[]', space=smem, size = 0x4, offset = 0x4, fixed_abs, tag = 'smem constant byte address 0x4 - core index']
  #allocation1 [shape = 'u32[144,128]{1,0:T(1,128)}', space=vmem, size = 0x12000, scoped, tag = 'internal scratch']
  %s0 = inlined_call_operand.vmem [shape: bf16[128,128], index: 0, kind: input, shape index: {}]
  %s1 = inlined_call_operand.vmem [shape: bf16[128,256], index: 1, kind: input, shape index: {}]
  %s2 = inlined_call_operand.vmem [shape: f32[1,256], index: 2, kind: input, shape index: {}]
  %s3 = inlined_call_operand.vmem [shape: bf16[256,128], index: 3, kind: input, shape index: {}]
  %s4 = inlined_call_operand.vmem [shape: f32[1,128], index: 4, kind: input, shape index: {}]
  %s5 = inlined_call_operand.hbm [shape: f32[128,128], index: 5, kind: output, shape index: {}]
  %s6 = sld [smem:[#allocation0]]
  $region53: #{mlp_pallas.1} parent=0
    _
  %s8 = ssub.s32 1, %s6
  %s9 = scalar_select 0, %s8, %s6
  $region1: #{mlp_pallas.1} parent=0
    #allocation2 [shape = 'u8[65536]{0}', space=vmem, size = 0x10000, scoped, tag = 'output window, operand 0']
    #allocation3 [shape = 's32[2]{0}', space=sflag, size = 0x8, scoped, tag = 'scoped memory for mlp_pallas.1']
    %10 = vsyncpa [#allocation3], 0
    %s11 = scalar_lea.sflag [#allocation3], 1
    %12 = vsyncpa %s11, 0
    loop: start=0, step=1, limit=4
    $region2: #{mlp_pallas.1} parent=1 // loop_pre_header
      _
    $region3: #{mlp_pallas.1} parent=1 // loop_header
      %s14 = sphi 0, %s18
      %p15 = scmp.ge.s32.totalorder %s14, 4
      %s24 = sphi 0, %s26
      %s27 = sphi 0, %s24
      %s28 = sphi 0, %s27
      %s44 = sphi 0, %s28
      %s48 = sphi 0, %s48
      %s50 = sphi 0, %s48
      %s51 = sphi 0, %s50
      %s65 = sphi 0, %s51
      %s69 = sphi 0, %s69
      %s71 = sphi 0, %s69
      %s72 = sphi 0, %s71
      %s86 = sphi 0, %s72
      %s90 = sphi 0, %s90
      %s92 = sphi 0, %s90
      %s93 = sphi 0, %s92
      %s107 = sphi 0, %s93
      %s111 = sphi 0, %s111
      %s113 = sphi 0, %s111
      %s114 = sphi 0, %s113
      %s128 = sphi 0, %s114
      %s134 = sphi 0, %s136
      %s137 = sphi 0, %s134
      %s138 = sphi 0, %s137
      %s154 = sphi 0, %s138
    $region4: #{mlp_pallas.1} parent=1 // loop_header_branch
      %17 = sbr.rel (%p15) target = $region8
    $region5: #{mlp_pallas.1} parent=1 // loop_body
      %s19 = ssub.s32 %s14, 1
      %s20 = ssub.s32 %s14, 2
      %s21 = sadd.s32 %s14, 1
      %s22 = ssub.s32 %s14, %s21
      %p23 = scmp.eq.s32.totalorder %s22, 0
      %s25 = sadd.s32 %s24, 1
      %s26 = scalar_select %p23, %s24, %s25
      %p29 = pneg %p23
      %p30 = scmp.eq.s32.totalorder %s14, 1
      %p31 = por %p29, %p30
      %p32 = scmp.ne.s32.totalorder %s24, %s27
      %p33 = scmp.eq.s32.totalorder %s14, 0
      %p34 = por %p32, %p33
      %p35 = scmp.ne.s32.totalorder %s24, %s27
      %p36 = scmp.eq.s32.totalorder %s19, 1
      %p37 = por %p35, %p36
      %p38 = scmp.ne.s32.totalorder %s27, %s28
      %p39 = scmp.eq.s32.totalorder %s19, 0
      %p40 = por %p38, %p39
      %p41 = scmp.ne.s32.totalorder %s27, %s28
      %p42 = scmp.eq.s32.totalorder %s20, 1
      %p43 = por %p41, %p42
      %p45 = scmp.ne.s32.totalorder %s28, %s44
      %p46 = scmp.eq.s32.totalorder %s20, 0
      %p47 = por %p45, %p46
      %s49 = sadd.s32 %s48, 1
      %p52 = scmp.eq.s32.totalorder %s14, 1
      %p53 = scmp.ne.s32.totalorder %s48, %s50
      %p54 = scmp.eq.s32.totalorder %s14, 0
      %p55 = por %p53, %p54
      %p56 = scmp.ne.s32.totalorder %s48, %s50
      %p57 = scmp.eq.s32.totalorder %s19, 1
      %p58 = por %p56, %p57
      %p59 = scmp.ne.s32.totalorder %s50, %s51
      %p60 = scmp.eq.s32.totalorder %s19, 0
      %p61 = por %p59, %p60
      %p62 = scmp.ne.s32.totalorder %s50, %s51
      %p63 = scmp.eq.s32.totalorder %s20, 1
      %p64 = por %p62, %p63
      %p66 = scmp.ne.s32.totalorder %s51, %s65
      %p67 = scmp.eq.s32.totalorder %s20, 0
      %p68 = por %p66, %p67
      %s70 = sadd.s32 %s69, 1
      %p73 = scmp.eq.s32.totalorder %s14, 1
      %p74 = scmp.ne.s32.totalorder %s69, %s71
      %p75 = scmp.eq.s32.totalorder %s14, 0
      %p76 = por %p74, %p75
      %p77 = scmp.ne.s32.totalorder %s69, %s71
      %p78 = scmp.eq.s32.totalorder %s19, 1
      %p79 = por %p77, %p78
      %p80 = scmp.ne.s32.totalorder %s71, %s72
      %p81 = scmp.eq.s32.totalorder %s19, 0
      %p82 = por %p80, %p81
      %p83 = scmp.ne.s32.totalorder %s71, %s72
      %p84 = scmp.eq.s32.totalorder %s20, 1
      %p85 = por %p83, %p84
      %p87 = scmp.ne.s32.totalorder %s72, %s86
      %p88 = scmp.eq.s32.totalorder %s20, 0
      %p89 = por %p87, %p88
      %s91 = sadd.s32 %s90, 1
      %p94 = scmp.eq.s32.totalorder %s14, 1
      %p95 = scmp.ne.s32.totalorder %s90, %s92
      %p96 = scmp.eq.s32.totalorder %s14, 0
      %p97 = por %p95, %p96
      %p98 = scmp.ne.s32.totalorder %s90, %s92
      %p99 = scmp.eq.s32.totalorder %s19, 1
      %p100 = por %p98, %p99
      %p101 = scmp.ne.s32.totalorder %s92, %s93
      %p102 = scmp.eq.s32.totalorder %s19, 0
      %p103 = por %p101, %p102
      %p104 = scmp.ne.s32.totalorder %s92, %s93
      %p105 = scmp.eq.s32.totalorder %s20, 1
      %p106 = por %p104, %p105
      %p108 = scmp.ne.s32.totalorder %s93, %s107
      %p109 = scmp.eq.s32.totalorder %s20, 0
      %p110 = por %p108, %p109
      %s112 = sadd.s32 %s111, 1
      %p115 = scmp.eq.s32.totalorder %s14, 1
      %p116 = scmp.ne.s32.totalorder %s111, %s113
      %p117 = scmp.eq.s32.totalorder %s14, 0
      %p118 = por %p116, %p117
      %p119 = scmp.ne.s32.totalorder %s111, %s113
      %p120 = scmp.eq.s32.totalorder %s19, 1
      %p121 = por %p119, %p120
      %p122 = scmp.ne.s32.totalorder %s113, %s114
      %p123 = scmp.eq.s32.totalorder %s19, 0
      %p124 = por %p122, %p123
      %p125 = scmp.ne.s32.totalorder %s113, %s114
      %p126 = scmp.eq.s32.totalorder %s20, 1
      %p127 = por %p125, %p126
      %p129 = scmp.ne.s32.totalorder %s114, %s128
      %p130 = scmp.eq.s32.totalorder %s20, 0
      %p131 = por %p129, %p130
      %s132 = ssub.s32 %s14, %s21
      %p133 = scmp.eq.s32.totalorder %s132, 0
      %s135 = sadd.s32 %s134, 1
      %s136 = scalar_select %p133, %s134, %s135
      %p139 = pneg %p133
      %p140 = scmp.eq.s32.totalorder %s14, 1
      %p141 = por %p139, %p140
      %p142 = scmp.ne.s32.totalorder %s134, %s137
      %p143 = scmp.eq.s32.totalorder %s14, 0
      %p144 = por %p142, %p143
      %p145 = scmp.ne.s32.totalorder %s134, %s137
      %p146 = scmp.eq.s32.totalorder %s19, 1
      %p147 = por %p145, %p146
      %p148 = scmp.ne.s32.totalorder %s137, %s138
      %p149 = scmp.eq.s32.totalorder %s19, 0
      %p150 = por %p148, %p149
      %p151 = scmp.ne.s32.totalorder %s137, %s138
      %p152 = scmp.eq.s32.totalorder %s20, 1
      %p153 = por %p151, %p152
      %p155 = scmp.ne.s32.totalorder %s138, %s154
      %p156 = scmp.eq.s32.totalorder %s20, 0
      %p157 = por %p155, %p156
      %p158 = scmp.le.s32.totalorder 1, %s14
      %p159 = scmp.lt.s32.totalorder %s14, 3
      %p160 = pnand %p158, %p159
      %p161 = pneg %p160
      // Predicated region
      $region9: #{mlp_pallas.1} parent=5 // pred_check
        _
      $region10: #{mlp_pallas.1} parent=5 // pred_check_branch
        %163 = sbr.rel (%p160) target = $region12
      $region11: #{mlp_pallas.1} parent=5 // pred_region
        %s164 = ssub.s32 %s14, 1
        // Predicated region
        $region13: #{mlp_pallas.1} parent=11 // pred_check
          %p165 = pneg %p61
        $region14: #{mlp_pallas.1} parent=11 // pred_check_branch
          %167 = sbr.rel (%p165) target = $region16
        $region15: #{mlp_pallas.1} parent=11 // pred_region
          _
        $region16: #{mlp_pallas.1} parent=11 // pred_fallthru
          _
        // Predicated region
        $region17: #{mlp_pallas.1} parent=11 // pred_check
          %p168 = pneg %p82
        $region18: #{mlp_pallas.1} parent=11 // pred_check_branch
          %170 = sbr.rel (%p168) target = $region20
        $region19: #{mlp_pallas.1} parent=11 // pred_region
          _
        $region20: #{mlp_pallas.1} parent=11 // pred_fallthru
          _
        // Predicated region
        $region21: #{mlp_pallas.1} parent=11 // pred_check
          %p171 = pneg %p103
        $region22: #{mlp_pallas.1} parent=11 // pred_check_branch
          %173 = sbr.rel (%p171) target = $region24
        $region23: #{mlp_pallas.1} parent=11 // pred_region
          _
        $region24: #{mlp_pallas.1} parent=11 // pred_fallthru
          _
        // Predicated region
        $region25: #{mlp_pallas.1} parent=11 // pred_check
          %p174 = pneg %p124
        $region26: #{mlp_pallas.1} parent=11 // pred_check_branch
          %176 = sbr.rel (%p174) target = $region28
        $region27: #{mlp_pallas.1} parent=11 // pred_region
          _
        $region28: #{mlp_pallas.1} parent=11 // pred_fallthru
          _
      $region12: #{mlp_pallas.1} parent=5 // pred_fallthru
        _
      %p177 = scmp.lt.s32.totalorder %s14, 2
      // Predicated region
      $region29: #{mlp_pallas.1} parent=5 // pred_check
        %p178 = pneg %p177
      $region30: #{mlp_pallas.1} parent=5 // pred_check_branch
        %180 = sbr.rel (%p178) target = $region32
      $region31: #{mlp_pallas.1} parent=5 // pred_region
        // Predicated region
        $region33: #{mlp_pallas.1} parent=31 // pred_check
          %p181 = pneg %p34
        $region34: #{mlp_pallas.1} parent=31 // pred_check_branch
          %183 = sbr.rel (%p181) target = $region36
        $region35: #{mlp_pallas.1} parent=31 // pred_region
          %s184 = smul.u32 8, %s14
          %p185 = scmp.lt.s32.totalorder %s184, 15
          %s186 = scalar_select %p185, %s184, 15
          %s187 = smul.addr %s186, 4
          %s188 = scalar_lea.vmem %s0, %s187
          %s189 = smul.u32 8, %s14
        $region36: #{mlp_pallas.1} parent=31 // pred_fallthru
          _
      $region32: #{mlp_pallas.1} parent=5 // pred_fallthru
        _
      %p190 = scmp.le.s32.totalorder 1, %s14
      %p191 = scmp.lt.s32.totalorder %s14, 3
      %p192 = pnand %p190, %p191
      %p193 = pneg %p192
      // Predicated region
      $region37: #{mlp_pallas.1} parent=5 // pred_check
        _
      $region38: #{mlp_pallas.1} parent=5 // pred_check_branch
        %195 = sbr.rel (%p192) target = $region40
      $region39: #{mlp_pallas.1} parent=5 // pred_region
        %s196 = ssub.s32 %s14, 1
        %s197 = smul.u32 8, %s19
        %p198 = scmp.lt.s32.totalorder %s197, 15
        %s199 = scalar_select %p198, %s197, 15
        %s200 = smul.addr %s199, 4
        %s201 = scalar_lea.vmem %s0, %s200
        %p202 = pneg %p40
        %p203 = pneg %p37
        %p204 = pneg %p61
        %p205 = pneg %p58
        %p206 = pneg %p82
        %p207 = pneg %p79
        %p208 = pneg %p103
        %p209 = pneg %p100
        %p210 = pneg %p124
        %p211 = pneg %p121
        %p212 = pneg %p150
        %p213 = pneg %p147
        %s214 = sand.u32 %s137, 1
        %s215 = scalar_lea.sflag [#allocation3], %s214
        %s216 = sand.u32 %s137, 1
        %s217 = smul.addr %s216, 64
        %s218 = scalar_lea.vmem [#allocation2], %s217
        %s219 = smul.u32 8, %s19
        %p220 = scmp.lt.s32.totalorder %s219, 15
        %s221 = scalar_select %p220, %s219, 15
        %s222 = smul.addr %s221, 4
        %s223 = scalar_lea.vmem %s0, %s222
        %s224 = smul.u32 8, %s19
        %s225 = smul.u32 8, %s19
        %v227 = vld [vmem:[%s223] sm:$0xf]
        %v228 = vld [vmem:[%s223 + $0x4] sm:$0xf]
        %v229 = vld [vmem:[%s223 + $0x8] sm:$0xf]
        %v230 = vld [vmem:[%s223 + $0xc] sm:$0xf]
        %v231 = vld [vmem:[%s223 + $0x10] sm:$0xf]
        %v232 = vld [vmem:[%s223 + $0x14] sm:$0xf]
        %v233 = vld [vmem:[%s223 + $0x18] sm:$0xf]
        %v234 = vld [vmem:[%s223 + $0x1c] sm:$0xf]
        %v235 = vld [vmem:[%s1] sm:$0xff]
        %v236 = vld [vmem:[%s1 + $0x8] sm:$0xff]
        %v237 = vld [vmem:[%s1 + $0x10] sm:$0xff]
        %v238 = vld [vmem:[%s1 + $0x18] sm:$0xff]
        %v239 = vld [vmem:[%s1 + $0x20] sm:$0xff]
        %v240 = vld [vmem:[%s1 + $0x28] sm:$0xff]
        %v241 = vld [vmem:[%s1 + $0x30] sm:$0xff]
        %v242 = vld [vmem:[%s1 + $0x38] sm:$0xff]
        %v243 = vld [vmem:[%s1 + $0x40] sm:$0xff]
        %v244 = vld [vmem:[%s1 + $0x48] sm:$0xff]
        %v245 = vld [vmem:[%s1 + $0x50] sm:$0xff]
        %v246 = vld [vmem:[%s1 + $0x58] sm:$0xff]
        %v247 = vld [vmem:[%s1 + $0x60] sm:$0xff]
        %v248 = vld [vmem:[%s1 + $0x68] sm:$0xff]
        %v249 = vld [vmem:[%s1 + $0x70] sm:$0xff]
        %v250 = vld [vmem:[%s1 + $0x78] sm:$0xff]
        %v251 = vld [vmem:[%s2] sm:$0x3]
        %v253 = vlaneseq
        %v254 = vshrl.u32 %v253, 7
        %v255 = vsub.s32 0, %v254
        %v256 = vrot.slane %v251, %v255
        %v257 = vlaneseq
        %v258 = vshrl.u32 %v257, 7
        %v259 = vsub.s32 1, %v258
        %v260 = vrot.slane %v251, %v259
        %v271 = vunpack.c.l.b16 %v227
        %v272 = vunpack.c.l.b16 %v228
        %v273 = vunpack.c.l.b16 %v229
        %v274 = vunpack.c.l.b16 %v230
        %v275 = vunpack.c.l.b16 %v231
        %v276 = vunpack.c.l.b16 %v232
        %v277 = vunpack.c.l.b16 %v233
        %v278 = vunpack.c.l.b16 %v234
        %v279 = vpack.c.b16 %v272, %v271
        %v280 = vpack.c.b16 %v274, %v273
        %v281 = vpack.c.b16 %v276, %v275
        %v282 = vpack.c.b16 %v278, %v277
        %v303 = vunpack.c.l.b16 %v235
        %v304 = vunpack.c.h.b16 %v235
        %v305 = vunpack.c.l.b16 %v236
        %v306 = vunpack.c.h.b16 %v236
        %v307 = vunpack.c.l.b16 %v237
        %v308 = vunpack.c.h.b16 %v237
        %v309 = vunpack.c.l.b16 %v238
        %v310 = vunpack.c.h.b16 %v238
        %v311 = vunpack.c.l.b16 %v239
        %v312 = vunpack.c.h.b16 %v239
        %v313 = vunpack.c.l.b16 %v240
        %v314 = vunpack.c.h.b16 %v240
        %v315 = vunpack.c.l.b16 %v241
        %v316 = vunpack.c.h.b16 %v241
        %v317 = vunpack.c.l.b16 %v242
        %v318 = vunpack.c.h.b16 %v242
        %v319 = vunpack.c.l.b16 %v243
        %v320 = vunpack.c.h.b16 %v243
        %v321 = vunpack.c.l.b16 %v244
        %v322 = vunpack.c.h.b16 %v244
        %v323 = vunpack.c.l.b16 %v245
        %v324 = vunpack.c.h.b16 %v245
        %v325 = vunpack.c.l.b16 %v246
        %v326 = vunpack.c.h.b16 %v246
        %v327 = vunpack.c.l.b16 %v247
        %v328 = vunpack.c.h.b16 %v247
        %v329 = vunpack.c.l.b16 %v248
        %v330 = vunpack.c.h.b16 %v248
        %v331 = vunpack.c.l.b16 %v249
        %v332 = vunpack.c.h.b16 %v249
        %v333 = vunpack.c.l.b16 %v250
        %v334 = vunpack.c.h.b16 %v250
        %v335 = vpack.c.b16 %v305, %v303
        %v336 = vpack.c.b16 %v306, %v304
        %v337 = vpack.c.b16 %v309, %v307
        %v338 = vpack.c.b16 %v310, %v308
        %v339 = vpack.c.b16 %v313, %v311
        %v340 = vpack.c.b16 %v314, %v312
        %v341 = vpack.c.b16 %v317, %v315
        %v342 = vpack.c.b16 %v318, %v316
        %v343 = vpack.c.b16 %v321, %v319
        %v344 = vpack.c.b16 %v322, %v320
        %v345 = vpack.c.b16 %v325, %v323
        %v346 = vpack.c.b16 %v326, %v324
        %v347 = vpack.c.b16 %v329, %v327
        %v348 = vpack.c.b16 %v330, %v328
        %v349 = vpack.c.b16 %v333, %v331
        %v350 = vpack.c.b16 %v334, %v332
        %367 = vmatprep.subr.bf16.mxu0 %v350
        %368 = vmatpush1.bf16.msra.mxu0 %v349
        %369 = vmatprep.subr.bf16.mxu0 %v348
        %370 = vmatpush1.bf16.msra.mxu0 %v347
        %371 = vmatprep.subr.bf16.mxu0 %v346
        %372 = vmatpush1.bf16.msra.mxu0 %v345
        %373 = vmatprep.subr.bf16.mxu0 %v344
        %374 = vmatpush1.bf16.msra.mxu0 %v343
        %375 = vmatprep.subr.bf16.mxu0 %v342
        %376 = vmatpush1.bf16.msra.mxu0 %v341
        %377 = vmatprep.subr.bf16.mxu0 %v340
        %378 = vmatpush1.bf16.msra.mxu0 %v339
        %379 = vmatprep.subr.bf16.mxu0 %v338
        %380 = vmatpush1.bf16.msra.mxu0 %v337
        %381 = vmatprep.subr.bf16.mxu0 %v336
        %382 = vmatpush1.bf16.msra.mxu0 %v335
        %383 = vmatprep.subr.bf16.mxu0 0
        %384 = vmatpush2.bf16.msra.mxu0 0
        %385 = vmatprep.subr.bf16.mxu0 0
        %386 = vmatpush2.bf16.msra.mxu0 0
        %387 = vmatprep.subr.bf16.mxu0 0
        %388 = vmatpush2.bf16.msra.mxu0 0
        %389 = vmatprep.subr.bf16.mxu0 0
        %390 = vmatpush2.bf16.msra.mxu0 0
        %391 = vmatprep.subr.bf16.mxu0 0
        %392 = vmatpush2.bf16.msra.mxu0 0
        %393 = vmatprep.subr.bf16.mxu0 0
        %394 = vmatpush2.bf16.msra.mxu0 0
        %395 = vmatprep.subr.bf16.mxu0 0
        %396 = vmatpush2.bf16.msra.mxu0 0
        %397 = vmatprep.subr.bf16.mxu0 0
        %398 = vmatpush2.bf16.msra.mxu0 0
        %399 = vmatprep.mubr.bf16.mxu0 0
        %400 = vmatmul.mubr.bf16.gmra.mxu0 %v279
        %v401 = vpop.f32.mrf.mxu0
        %v402 = vadd.f32 %v256, %v401
        %v403 = vpop.f32.mrf.mxu0
        %v404 = vadd.f32 %v260, %v403
        %v405 = vpop.f32.mrf.mxu0
        %v406 = vadd.f32 %v256, %v405
        %v407 = vpop.f32.mrf.mxu0
        %v408 = vadd.f32 %v260, %v407
        %409 = vmatprep.mubr.bf16.mxu0 0
        %410 = vmatmul.mubr.bf16.gmra.mxu0 %v280
        %v411 = vpop.f32.mrf.mxu0
        %v412 = vadd.f32 %v256, %v411
        %v413 = vpop.f32.mrf.mxu0
        %v414 = vadd.f32 %v260, %v413
        %v415 = vpop.f32.mrf.mxu0
        %v416 = vadd.f32 %v256, %v415
        %v417 = vpop.f32.mrf.mxu0
        %v418 = vadd.f32 %v260, %v417
        %419 = vmatprep.mubr.bf16.mxu0 0
        %420 = vmatmul.mubr.bf16.gmra.mxu0 %v281
        %v421 = vpop.f32.mrf.mxu0
        %v422 = vadd.f32 %v256, %v421
        %v423 = vpop.f32.mrf.mxu0
        %v424 = vadd.f32 %v260, %v423
        %v425 = vpop.f32.mrf.mxu0
        %v426 = vadd.f32 %v256, %v425
        %v427 = vpop.f32.mrf.mxu0
        %v428 = vadd.f32 %v260, %v427
        %429 = vmatprep.mubr.bf16.mxu0 0
        %430 = vmatmul.mubr.bf16.gmra.mxu0 %v282
        %v431 = vpop.f32.mrf.mxu0
        %v432 = vadd.f32 %v256, %v431
        %v433 = vpop.f32.mrf.mxu0
        %v434 = vadd.f32 %v260, %v433
        %v435 = vpop.f32.mrf.mxu0
        %v436 = vadd.f32 %v256, %v435
        %v437 = vpop.f32.mrf.mxu0
        %v438 = vadd.f32 %v260, %v437
        %439 = vdwg.mxu0
        %v440 = vxor.u32 %v402, 2147483648
        %v441 = vxor.u32 %v404, 2147483648
        %v442 = vxor.u32 %v406, 2147483648
        %v443 = vxor.u32 %v408, 2147483648
        %v444 = vxor.u32 %v412, 2147483648
        %v445 = vxor.u32 %v414, 2147483648
        %v446 = vxor.u32 %v416, 2147483648
        %v447 = vxor.u32 %v418, 2147483648
        %v448 = vxor.u32 %v422, 2147483648
        %v449 = vxor.u32 %v424, 2147483648
        %v450 = vxor.u32 %v426, 2147483648
        %v451 = vxor.u32 %v428, 2147483648
        %v452 = vxor.u32 %v432, 2147483648
        %v453 = vxor.u32 %v434, 2147483648
        %v454 = vxor.u32 %v436, 2147483648
        %v455 = vxor.u32 %v438, 2147483648
        %v456 = vmul.f32 %v440, 1.442695
        %v457 = vpow.pop %v456
        %v458 = vmul.f32 %v441, 1.442695
        %v459 = vpow.pop %v458
        %v460 = vmul.f32 %v442, 1.442695
        %v461 = vpow.pop %v460
        %v462 = vmul.f32 %v443, 1.442695
        %v463 = vpow.pop %v462
        %v464 = vmul.f32 %v444, 1.442695
        %v465 = vpow.pop %v464
        %v466 = vmul.f32 %v445, 1.442695
        %v467 = vpow.pop %v466
        %v468 = vmul.f32 %v446, 1.442695
        %v469 = vpow.pop %v468
        %v470 = vmul.f32 %v447, 1.442695
        %v471 = vpow.pop %v470
        %v472 = vmul.f32 %v448, 1.442695
        %v473 = vpow.pop %v472
        %v474 = vmul.f32 %v449, 1.442695
        %v475 = vpow.pop %v474
        %v476 = vmul.f32 %v450, 1.442695
        %v477 = vpow.pop %v476
        %v478 = vmul.f32 %v451, 1.442695
        %v479 = vpow.pop %v478
        %v480 = vmul.f32 %v452, 1.442695
        %v481 = vpow.pop %v480
        %v482 = vmul.f32 %v453, 1.442695
        %v483 = vpow.pop %v482
        %v484 = vmul.f32 %v454, 1.442695
        %v485 = vpow.pop %v484
        %v486 = vmul.f32 %v455, 1.442695
        %v487 = vpow.pop %v486
        %v488 = vadd.f32 %v457, 1.0
        %v489 = vadd.f32 %v459, 1.0
        %v490 = vadd.f32 %v461, 1.0
        %v491 = vadd.f32 %v463, 1.0
        %v492 = vadd.f32 %v465, 1.0
        %v493 = vadd.f32 %v467, 1.0
        %v494 = vadd.f32 %v469, 1.0
        %v495 = vadd.f32 %v471, 1.0
        %v496 = vadd.f32 %v473, 1.0
        %v497 = vadd.f32 %v475, 1.0
        %v498 = vadd.f32 %v477, 1.0
        %v499 = vadd.f32 %v479, 1.0
        %v500 = vadd.f32 %v481, 1.0
        %v501 = vadd.f32 %v483, 1.0
        %v502 = vadd.f32 %v485, 1.0
        %v503 = vadd.f32 %v487, 1.0
        %v504 = vrcp.pop %v488
        %v505 = vmul.f32 1.0, %v504
        %v506 = vrcp.pop %v489
        %v507 = vmul.f32 1.0, %v506
        %v508 = vrcp.pop %v490
        %v509 = vmul.f32 1.0, %v508
        %v510 = vrcp.pop %v491
        %v511 = vmul.f32 1.0, %v510
        %v512 = vrcp.pop %v492
        %v513 = vmul.f32 1.0, %v512
        %v514 = vrcp.pop %v493
        %v515 = vmul.f32 1.0, %v514
        %v516 = vrcp.pop %v494
        %v517 = vmul.f32 1.0, %v516
        %v518 = vrcp.pop %v495
        %v519 = vmul.f32 1.0, %v518
        %v520 = vrcp.pop %v496
        %v521 = vmul.f32 1.0, %v520
        %v522 = vrcp.pop %v497
        %v523 = vmul.f32 1.0, %v522
        %v524 = vrcp.pop %v498
        %v525 = vmul.f32 1.0, %v524
        %v526 = vrcp.pop %v499
        %v527 = vmul.f32 1.0, %v526
        %v528 = vrcp.pop %v500
        %v529 = vmul.f32 1.0, %v528
        %v530 = vrcp.pop %v501
        %v531 = vmul.f32 1.0, %v530
        %v532 = vrcp.pop %v502
        %v533 = vmul.f32 1.0, %v532
        %v534 = vrcp.pop %v503
        %v535 = vmul.f32 1.0, %v534
        %v536 = vmul.f32 %v402, %v505
        %v537 = vmul.f32 %v404, %v507
        %v538 = vmul.f32 %v406, %v509
        %v539 = vmul.f32 %v408, %v511
        %v540 = vmul.f32 %v412, %v513
        %v541 = vmul.f32 %v414, %v515
        %v542 = vmul.f32 %v416, %v517
        %v543 = vmul.f32 %v418, %v519
        %v544 = vmul.f32 %v422, %v521
        %v545 = vmul.f32 %v424, %v523
        %v546 = vmul.f32 %v426, %v525
        %v547 = vmul.f32 %v428, %v527
        %v548 = vmul.f32 %v432, %v529
        %v549 = vmul.f32 %v434, %v531
        %v550 = vmul.f32 %v436, %v533
        %v551 = vmul.f32 %v438, %v535
        %v552 = vpack.c.bf16 %v538, %v536
        %v553 = vpack.c.bf16 %v539, %v537
        %v554 = vpack.c.bf16 %v542, %v540
        %v555 = vpack.c.bf16 %v543, %v541
        %v556 = vpack.c.bf16 %v546, %v544
        %v557 = vpack.c.bf16 %v547, %v545
        %v558 = vpack.c.bf16 %v550, %v548
        %v559 = vpack.c.bf16 %v551, %v549
        %v560 = vld [vmem:[%s3] sm:$0xf]
        %v561 = vld [vmem:[%s3 + $0x4] sm:$0xf]
        %v562 = vld [vmem:[%s3 + $0x8] sm:$0xf]
        %v563 = vld [vmem:[%s3 + $0xc] sm:$0xf]
        %v564 = vld [vmem:[%s3 + $0x10] sm:$0xf]
        %v565 = vld [vmem:[%s3 + $0x14] sm:$0xf]
        %v566 = vld [vmem:[%s3 + $0x18] sm:$0xf]
        %v567 = vld [vmem:[%s3 + $0x1c] sm:$0xf]
        %v568 = vld [vmem:[%s3 + $0x20] sm:$0xf]
        %v569 = vld [vmem:[%s3 + $0x24] sm:$0xf]
        %v570 = vld [vmem:[%s3 + $0x28] sm:$0xf]
        %v571 = vld [vmem:[%s3 + $0x2c] sm:$0xf]
        %v572 = vld [vmem:[%s3 + $0x30] sm:$0xf]
        %v573 = vld [vmem:[%s3 + $0x34] sm:$0xf]
        %v574 = vld [vmem:[%s3 + $0x38] sm:$0xf]
        %v575 = vld [vmem:[%s3 + $0x3c] sm:$0xf]
        %v576 = vld [vmem:[%s3 + $0x40] sm:$0xf]
        %v577 = vld [vmem:[%s3 + $0x44] sm:$0xf]
        %v578 = vld [vmem:[%s3 + $0x48] sm:$0xf]
        %v579 = vld [vmem:[%s3 + $0x4c] sm:$0xf]
        %v580 = vld [vmem:[%s3 + $0x50] sm:$0xf]
        %v581 = vld [vmem:[%s3 + $0x54] sm:$0xf]
        %v582 = vld [vmem:[%s3 + $0x58] sm:$0xf]
        %v583 = vld [vmem:[%s3 + $0x5c] sm:$0xf]
        %v584 = vld [vmem:[%s3 + $0x60] sm:$0xf]
        %v585 = vld [vmem:[%s3 + $0x64] sm:$0xf]
        %v586 = vld [vmem:[%s3 + $0x68] sm:$0xf]
        %v587 = vld [vmem:[%s3 + $0x6c] sm:$0xf]
        %v588 = vld [vmem:[%s3 + $0x70] sm:$0xf]
        %v589 = vld [vmem:[%s3 + $0x74] sm:$0xf]
        %v590 = vld [vmem:[%s3 + $0x78] sm:$0xf]
        %v591 = vld [vmem:[%s3 + $0x7c] sm:$0xf]
        %v592 = vld [vmem:[%s4] sm:$0x1]
        %v594 = vlaneseq
        %v595 = vshrl.u32 %v594, 7
        %v596 = vsub.s32 0, %v595
        %v597 = vrot.slane %v592, %v596
        %v631 = vunpack.c.l.b16 %v560
        %v632 = vunpack.c.l.b16 %v561
        %v633 = vunpack.c.l.b16 %v562
        %v634 = vunpack.c.l.b16 %v563
        %v635 = vunpack.c.l.b16 %v564
        %v636 = vunpack.c.l.b16 %v565
        %v637 = vunpack.c.l.b16 %v566
        %v638 = vunpack.c.l.b16 %v567
        %v639 = vunpack.c.l.b16 %v568
        %v640 = vunpack.c.l.b16 %v569
        %v641 = vunpack.c.l.b16 %v570
        %v642 = vunpack.c.l.b16 %v571
        %v643 = vunpack.c.l.b16 %v572
        %v644 = vunpack.c.l.b16 %v573
        %v645 = vunpack.c.l.b16 %v574
        %v646 = vunpack.c.l.b16 %v575
        %v647 = vunpack.c.l.b16 %v576
        %v648 = vunpack.c.l.b16 %v577
        %v649 = vunpack.c.l.b16 %v578
        %v650 = vunpack.c.l.b16 %v579
        %v651 = vunpack.c.l.b16 %v580
        %v652 = vunpack.c.l.b16 %v581
        %v653 = vunpack.c.l.b16 %v582
        %v654 = vunpack.c.l.b16 %v583
        %v655 = vunpack.c.l.b16 %v584
        %v656 = vunpack.c.l.b16 %v585
        %v657 = vunpack.c.l.b16 %v586
        %v658 = vunpack.c.l.b16 %v587
        %v659 = vunpack.c.l.b16 %v588
        %v660 = vunpack.c.l.b16 %v589
        %v661 = vunpack.c.l.b16 %v590
        %v662 = vunpack.c.l.b16 %v591
        %v663 = vpack.c.b16 %v632, %v631
        %v664 = vpack.c.b16 %v634, %v633
        %v665 = vpack.c.b16 %v636, %v635
        %v666 = vpack.c.b16 %v638, %v637
        %v667 = vpack.c.b16 %v640, %v639
        %v668 = vpack.c.b16 %v642, %v641
        %v669 = vpack.c.b16 %v644, %v643
        %v670 = vpack.c.b16 %v646, %v645
        %v671 = vpack.c.b16 %v648, %v647
        %v672 = vpack.c.b16 %v650, %v649
        %v673 = vpack.c.b16 %v652, %v651
        %v674 = vpack.c.b16 %v654, %v653
        %v675 = vpack.c.b16 %v656, %v655
        %v676 = vpack.c.b16 %v658, %v657
        %v677 = vpack.c.b16 %v660, %v659
        %v678 = vpack.c.b16 %v662, %v661
        %695 = vmatprep.subr.bf16.mxu0 0
        %696 = vmatpush1.bf16.msra.mxu0 %v670
        %697 = vmatprep.subr.bf16.mxu0 0
        %698 = vmatpush1.bf16.msra.mxu0 %v669
        %699 = vmatprep.subr.bf16.mxu0 0
        %700 = vmatpush1.bf16.msra.mxu0 %v668
        %701 = vmatprep.subr.bf16.mxu0 0
        %702 = vmatpush1.bf16.msra.mxu0 %v667
        %703 = vmatprep.subr.bf16.mxu0 0
        %704 = vmatpush1.bf16.msra.mxu0 %v666
        %705 = vmatprep.subr.bf16.mxu0 0
        %706 = vmatpush1.bf16.msra.mxu0 %v665
        %707 = vmatprep.subr.bf16.mxu0 0
        %708 = vmatpush1.bf16.msra.mxu0 %v664
        %709 = vmatprep.subr.bf16.mxu0 0
        %710 = vmatpush1.bf16.msra.mxu0 %v663
        %711 = vmatprep.subr.bf16.mxu0 0
        %712 = vmatpush2.bf16.msra.mxu0 %v678
        %713 = vmatprep.subr.bf16.mxu0 0
        %714 = vmatpush2.bf16.msra.mxu0 %v677
        %715 = vmatprep.subr.bf16.mxu0 0
        %716 = vmatpush2.bf16.msra.mxu0 %v676
        %717 = vmatprep.subr.bf16.mxu0 0
        %718 = vmatpush2.bf16.msra.mxu0 %v675
        %719 = vmatprep.subr.bf16.mxu0 0
        %720 = vmatpush2.bf16.msra.mxu0 %v674
        %721 = vmatprep.subr.bf16.mxu0 0
        %722 = vmatpush2.bf16.msra.mxu0 %v673
        %723 = vmatprep.subr.bf16.mxu0 0
        %724 = vmatpush2.bf16.msra.mxu0 %v672
        %725 = vmatprep.subr.bf16.mxu0 0
        %726 = vmatpush2.bf16.msra.mxu0 %v671
        %727 = vmatprep.mubr.bf16.mxu0 %v553
        %728 = vmatmul.mubr.bf16.gmra.mxu0 %v552
        %v729 = vpop.f32.mrf.mxu0
        %v730 = vadd.f32 %v597, %v729
        %v731 = vpop.f32.mrf.mxu0
        %v732 = vpop.f32.mrf.mxu0
        %v733 = vadd.f32 %v597, %v732
        %v734 = vpop.f32.mrf.mxu0
        %735 = vmatprep.mubr.bf16.mxu0 %v555
        %736 = vmatmul.mubr.bf16.gmra.mxu0 %v554
        %v737 = vpop.f32.mrf.mxu0
        %v738 = vadd.f32 %v597, %v737
        %v739 = vpop.f32.mrf.mxu0
        %v740 = vpop.f32.mrf.mxu0
        %v741 = vadd.f32 %v597, %v740
        %v742 = vpop.f32.mrf.mxu0
        %743 = vmatprep.mubr.bf16.mxu0 %v557
        %744 = vmatmul.mubr.bf16.gmra.mxu0 %v556
        %v745 = vpop.f32.mrf.mxu0
        %v746 = vadd.f32 %v597, %v745
        %v747 = vpop.f32.mrf.mxu0
        %v748 = vpop.f32.mrf.mxu0
        %v749 = vadd.f32 %v597, %v748
        %v750 = vpop.f32.mrf.mxu0
        %751 = vmatprep.mubr.bf16.mxu0 %v559
        %752 = vmatmul.mubr.bf16.gmra.mxu0 %v558
        %v753 = vpop.f32.mrf.mxu0
        %v754 = vadd.f32 %v597, %v753
        %v755 = vpop.f32.mrf.mxu0
        %v756 = vpop.f32.mrf.mxu0
        %v757 = vadd.f32 %v597, %v756
        %v758 = vpop.f32.mrf.mxu0
        %759 = vdwg.mxu0
        %760 = vst [vmem:[%s218] sm:$0xff] %v730
        %761 = vst [vmem:[%s218 + $0x8] sm:$0xff] %v733
        %762 = vst [vmem:[%s218 + $0x10] sm:$0xff] %v738
        %763 = vst [vmem:[%s218 + $0x18] sm:$0xff] %v741
        %764 = vst [vmem:[%s218 + $0x20] sm:$0xff] %v746
        %765 = vst [vmem:[%s218 + $0x28] sm:$0xff] %v749
        %766 = vst [vmem:[%s218 + $0x30] sm:$0xff] %v754
        %767 = vst [vmem:[%s218 + $0x38] sm:$0xff] %v757
        %s768 = sand.u32 %s137, 1
        %s769 = scalar_lea.sflag [#allocation3], %s768
        %s770 = sand.u32 %s137, 1
        %s771 = smul.addr %s770, 64
        %s772 = scalar_lea.vmem [#allocation2], %s771
        // Predicated region
        $region41: #{mlp_pallas.1} parent=39 // pred_check
          %p773 = pneg %p147
        $region42: #{mlp_pallas.1} parent=39 // pred_check_branch
          %775 = sbr.rel (%p773) target = $region44
        $region43: #{mlp_pallas.1} parent=39 // pred_region
          %s776 = smul.u32 8, %s19
          %s778 = ssub.s32 1024, 1024
          %779 = vsyncadd %s769, %s778
          %s780 = smul.addr %s776, 128
          %s781 = scalar_lea.hbm %s5, %s780
          %s782 = sshll.u32 %s772, 4
          %s783 = int_to_ptr.vmem [resolvable:$true] %s782
          %788 = dma.vmem_to_hbm [thread:$0]  %s783, 1024, %s781, %s769, 128, 128, 8
        $region44: #{mlp_pallas.1} parent=39 // pred_fallthru
          _
      $region40: #{mlp_pallas.1} parent=5 // pred_fallthru
        _
      %p789 = scmp.le.s32.totalorder 2, %s14
      // Predicated region
      $region45: #{mlp_pallas.1} parent=5 // pred_check
        %p790 = pneg %p789
      $region46: #{mlp_pallas.1} parent=5 // pred_check_branch
        %792 = sbr.rel (%p790) target = $region48
      $region47: #{mlp_pallas.1} parent=5 // pred_region
        %s793 = ssub.s32 %s14, 2
        // Predicated region
        $region49: #{mlp_pallas.1} parent=47 // pred_check
          %p794 = pneg %p153
        $region50: #{mlp_pallas.1} parent=47 // pred_check_branch
          %796 = sbr.rel (%p794) target = $region52
        $region51: #{mlp_pallas.1} parent=47 // pred_region
          %s797 = sand.u32 %s138, 1
          %s798 = scalar_lea.sflag [#allocation3], %s797
          %s799 = sand.u32 %s138, 1
          %s800 = smul.addr %s799, 64
          %s801 = scalar_lea.vmem [#allocation2], %s800
          %802 = dma.done %s798, 1024
        $region52: #{mlp_pallas.1} parent=47 // pred_fallthru
          _
      $region48: #{mlp_pallas.1} parent=5 // pred_fallthru
        _
    $region6: #{mlp_pallas.1} parent=1 // loop_footer
      %s18 = sadd.s32 1, %s14
    $region7: #{mlp_pallas.1} parent=1 // loop_footer_branch
      %13 = sbr.rel target = $region3
    $region8: #{mlp_pallas.1} parent=1 // loop_exit
      _
    %803 = vsyncpa [#allocation3], 1
    %s804 = scalar_lea.sflag [#allocation3], 1
    %805 = vsyncpa %s804, 1

</llo_original>
